<compile_context>
chip_gen: v7x
topology: tpu7x:2x2x1
jax: 0.10.0
libtpu: 0.0.40
codegen_flags: <defaults>
</compile_context>

<pallas_src>
import functools

import jax
import jax.numpy as jnp
from jax.experimental import pallas as pl
from jax.experimental.pallas import tpu as pltpu


def _round_up(a, m):
    return ((a + m - 1) // m) * m


# ----------------------------- Pallas kernel ---------------------------------
def _expr_decoder_kernel(x_ref, w1_ref, b1_ref, w2_ref, b2_ref, w3_ref, b3_ref,
                         out_ref, *, negative_slope, explicit_zero_prob):
    """One row tile of the (optionally head-fused) 3-layer MLP.

    x_ref   : (TR, d_in)  compute dtype (bf16 by default)
    w1_ref  : (d_in, H)   H = d_model (or 2*d_model when the two heads are fused)
    w2_ref  : (H, H)      block-diagonal when fused
    w3_ref  : (H, C)      C = 1 (pred only) or 2 (pred, zero_logit)
    b*_ref  : f32 biases, shapes (1, H) / (1, H) / (1, C)
    out_ref : (TR, C)     f32
    """
    x = x_ref[...]

    h = jnp.dot(x, w1_ref[...], preferred_element_type=jnp.float32) + b1_ref[...]
    h = jnp.maximum(h, negative_slope * h)                       # LeakyReLU

    h = jnp.dot(h.astype(w2_ref.dtype), w2_ref[...],
                preferred_element_type=jnp.float32) + b2_ref[...]
    h = jnp.maximum(h, negative_slope * h)

    # (TR, H) @ (H, C): natural MXU orientation -> no transpose of the big
    # activation; the tiny (TR, C<=2) store is negligible output traffic.
    out = jnp.dot(h.astype(w3_ref.dtype), w3_ref[...],
                  preferred_element_type=jnp.float32) + b3_ref[...]

    if explicit_zero_prob:
        # column 0 = pred (identity), column 1 = sigmoid(zero_logit)   (EUP slot)
        col = jax.lax.broadcasted_iota(jnp.int32, out.shape, 1)
        out = jnp.where(col == 0, out, jax.nn.sigmoid(out))

    out_ref[...] = out.astype(out_ref.dtype)


# ------------------------------- wrapper --------------------------------------
def expr_decoder(x, params, *, explicit_zero_prob=False, block_rows=2048,
                 compute_dtype=jnp.bfloat16, negative_slope=0.01):
    """x: (B, S, d_in) float32. params: PyTorch-layout weights (out, in)."""
    assert block_rows % 128 == 0, "block_rows must be a multiple of 128"
    B, S, d_in = x.shape
    D = params["fc1_w"].shape[0]
    R = B * S

    # ---- row-slab layout glue (plain JAX, outside the kernel) ----
    TR = _round_up(R, 8) if R <= block_rows else block_rows
    n_tiles = -(-R // TR)
    Rp = n_tiles * TR
    x2d = x.reshape(R, d_in).astype(compute_dtype)
    if Rp != R:
        x2d = jnp.pad(x2d, ((0, Rp - R), (0, 0)))

    # ---- weights: PyTorch (out, in) -> matmul (in, out); fuse heads if asked ----
    f32 = jnp.float32
    if explicit_zero_prob:
        zDD = jnp.zeros((D, D), f32)
        zD1 = jnp.zeros((D, 1), f32)
        w1 = jnp.concatenate([params["fc1_w"].T, params["zero1_w"].T], axis=1)    # (d_in, 2D)
        b1 = jnp.concatenate([params["fc1_b"], params["zero1_b"]]).reshape(1, 2 * D)
        w2 = jnp.concatenate(                                                      # (2D, 2D)
            [jnp.concatenate([params["fc2_w"].T, zDD], axis=1),
             jnp.concatenate([zDD, params["zero2_w"].T], axis=1)], axis=0)
        b2 = jnp.concatenate([params["fc2_b"], params["zero2_b"]]).reshape(1, 2 * D)
        w3 = jnp.concatenate(                                                      # (2D, 2)
            [jnp.concatenate([params["fc3_w"].T, zD1], axis=0),
             jnp.concatenate([zD1, params["zero3_w"].T], axis=0)], axis=1)
        b3 = jnp.concatenate([params["fc3_b"], params["zero3_b"]]).reshape(1, 2)
        C = 2
    else:
        w1 = params["fc1_w"].T                                                     # (d_in, D)
        b1 = params["fc1_b"].reshape(1, D)
        w2 = params["fc2_w"].T                                                     # (D, D)
        b2 = params["fc2_b"].reshape(1, D)
        w3 = params["fc3_w"].T                                                     # (D, 1)
        b3 = params["fc3_b"].reshape(1, 1)
        C = 1

    H = w1.shape[1]
    weights = [w1.astype(compute_dtype), b1.astype(f32),
               w2.astype(compute_dtype), b2.astype(f32),
               w3.astype(compute_dtype), b3.astype(f32)]

    kernel = functools.partial(_expr_decoder_kernel,
                               negative_slope=negative_slope,
                               explicit_zero_prob=explicit_zero_prob)

    # VMEM budget: double-buffered x/out tiles + weights (with 2x headroom in
    # case the single-buffer request is ignored), clamped so it also respects
    # v7x's 64 MiB physical VMEM.
    itemsize = jnp.dtype(compute_dtype).itemsize
    need = (2 * TR * d_in * itemsize + 2 * TR * C * 4
            + 2 * ((d_in * H + H * H + H * C) * itemsize + (2 * H + C) * 4))
    vmem_limit = int(min(48 * 1024 * 1024, max(32 * 1024 * 1024, 2 * need)))

    def build_and_call(single_buffer_weights):
        wspec_kwargs = ({"pipeline_mode": pl.Buffered(1)}
                        if single_buffer_weights else {})

        def const_spec(a):   # same block every grid step -> stays VMEM-resident
            return pl.BlockSpec(a.shape, lambda i: (0, 0), **wspec_kwargs)

        in_specs = [pl.BlockSpec((TR, d_in), lambda i: (i, 0))] + [
            const_spec(w) for w in weights]
        out_specs = pl.BlockSpec((TR, C), lambda i: (i, 0))

        return pl.pallas_call(
            kernel,
            out_shape=jax.ShapeDtypeStruct((Rp, C), jnp.float32),
            grid_spec=pltpu.PrefetchScalarGridSpec(
                num_scalar_prefetch=0,
                grid=(n_tiles,),
                in_specs=in_specs,
                out_specs=out_specs),
            compiler_params=pltpu.CompilerParams(
                dimension_semantics=("parallel",),
                vmem_limit_bytes=vmem_limit),
        )(x2d, *weights)

    try:
        out = build_and_call(True)    # single-buffer the constant weights (v7x VMEM)
    except Exception:                 # fall back if pipeline_mode/Buffered(1) rejected
        out = build_and_call(False)

    pred = out[:R, 0].reshape(B, S)
    if explicit_zero_prob:
        return {"pred": pred, "zero_probs": out[:R, 1].reshape(B, S)}
    return {"pred": pred}


# --------------------------- pure-JAX reference --------------------------------
def reference(x, params, *, explicit_zero_prob=False, negative_slope=0.01):
    def lrelu(t):
        return jnp.where(t > 0, t, negative_slope * t)

    def head(prefix):
        h = x @ params[f"{prefix}1_w"].T + params[f"{prefix}1_b"]
        h = lrelu(h)
        h = h @ params[f"{prefix}2_w"].T + params[f"{prefix}2_b"]
        h = lrelu(h)
        h = h @ params[f"{prefix}3_w"].T + params[f"{prefix}3_b"]
        return h[..., 0]

    pred = head("fc")
    if not explicit_zero_prob:
        return {"pred": pred}
    return {"pred": pred, "zero_probs": jax.nn.sigmoid(head("zero"))}


# ----------------------------------- main ---------------------------------------
if __name__ == "__main__":
    B, S, D = 2, 16, 64          # d_model=64, use_batch_labels=False -> d_in = D
    key = jax.random.PRNGKey(0)
    ks = jax.random.split(key, 13)

    def init(k, shape, scale=0.1):
        return (scale * jax.random.normal(k, shape)).astype(jnp.float32)

    params = {
        "fc1_w": init(ks[0], (D, D)),    "fc1_b": init(ks[1], (D,)),
        "fc2_w": init(ks[2], (D, D)),    "fc2_b": init(ks[3], (D,)),
        "fc3_w": init(ks[4], (1, D)),    "fc3_b": init(ks[5], (1,)),
        "zero1_w": init(ks[6], (D, D)),  "zero1_b": init(ks[7], (D,)),
        "zero2_w": init(ks[8], (D, D)),  "zero2_b": init(ks[9], (D,)),
        "zero3_w": init(ks[10], (1, D)), "zero3_b": init(ks[11], (1,)),
    }
    x = jax.random.normal(ks[12], (B, S, D), jnp.float32)

    def check(got, want, atol, rtol, tag):
        for k in want:
            assert got[k].shape == want[k].shape, (tag, k, got[k].shape, want[k].shape)
            err = float(jnp.max(jnp.abs(got[k] - want[k])))
            assert jnp.allclose(got[k], want[k], atol=atol, rtol=rtol), (tag, k, err)

    for ezp in (False, True):
        ref = reference(x, params, explicit_zero_prob=ezp)

        # f32 compute path: tight correctness gate against the pure-JAX reference.
        out32 = jax.block_until_ready(
            expr_decoder(x, params, explicit_zero_prob=ezp,
                         compute_dtype=jnp.float32))
        check(out32, ref, 1e-3, 1e-3, f"f32 ezp={ezp}")

        # bf16 compute path (default / perf config): looser tolerance (bf16
        # inputs/weights, f32 accumulation).
        outbf = jax.block_until_ready(
            expr_decoder(x, params, explicit_zero_prob=ezp))
        check(outbf, ref, 3e-2, 3e-2, f"bf16 ezp={ezp}")

    print("KERNEL_OK")
</pallas_src>

<mosaic_0001>
module attributes {stable_mosaic.version = 11 : i64} {
  func.func @_expr_decoder_kernel(%arg0: i32, %arg1: memref<32x64xf32, #tpu.memory_space<vmem>>, %arg2: memref<64x64xf32, #tpu.memory_space<vmem>>, %arg3: memref<1x64xf32, #tpu.memory_space<vmem>>, %arg4: memref<64x64xf32, #tpu.memory_space<vmem>>, %arg5: memref<1x64xf32, #tpu.memory_space<vmem>>, %arg6: memref<64x1xf32, #tpu.memory_space<vmem>>, %arg7: memref<1x1xf32, #tpu.memory_space<vmem>>, %arg8: memref<32x1xf32, #tpu.memory_space<vmem>>) attributes {dimension_semantics = [#tpu.dimension_semantics<parallel>], iteration_bounds = array<i64: 1>, scalar_prefetch = 0 : i64, scratch_operands = 0 : i64, tpu.core_type = #tpu.core_type<tc>, window_params = [{transform_indices = @transform_0, window_bounds = array<i64: 32, 64>}, {pipeline_mode = #tpu.pipeline_mode<synchronous>, transform_indices = @transform_1, window_bounds = array<i64: 64, 64>}, {pipeline_mode = #tpu.pipeline_mode<synchronous>, transform_indices = @transform_2, window_bounds = array<i64: 1, 64>}, {pipeline_mode = #tpu.pipeline_mode<synchronous>, transform_indices = @transform_3, window_bounds = array<i64: 64, 64>}, {pipeline_mode = #tpu.pipeline_mode<synchronous>, transform_indices = @transform_4, window_bounds = array<i64: 1, 64>}, {pipeline_mode = #tpu.pipeline_mode<synchronous>, transform_indices = @transform_5, window_bounds = array<i64: 64, 1>}, {pipeline_mode = #tpu.pipeline_mode<synchronous>, transform_indices = @transform_6, window_bounds = array<i64: 1, 1>}, {transform_indices = @transform_7, window_bounds = array<i64: 32, 1>}]} {
    %c0 = arith.constant 0 : index
    %c0_0 = arith.constant 0 : index
    %0 = vector.load %arg1[%c0, %c0_0] : memref<32x64xf32, #tpu.memory_space<vmem>>, vector<32x64xf32>
    %c0_1 = arith.constant 0 : index
    %c0_2 = arith.constant 0 : index
    %1 = vector.load %arg2[%c0_1, %c0_2] : memref<64x64xf32, #tpu.memory_space<vmem>>, vector<64x64xf32>
    %cst = arith.constant dense<0.000000e+00> : vector<32x64xf32>
    %2 = tpu.matmul %0, %1, %cst {dimension_numbers = #tpu.dot_dimension_numbers<[1], [0], [0], [1], [0, 0, 1, 1], [], []>} : vector<32x64xf32>, vector<64x64xf32>, vector<32x64xf32> -> vector<32x64xf32>
    %c0_3 = arith.constant 0 : index
    %c0_4 = arith.constant 0 : index
    %3 = vector.load %arg3[%c0_3, %c0_4] : memref<1x64xf32, #tpu.memory_space<vmem>>, vector<1x64xf32>
    %4 = vector.broadcast %3 : vector<1x64xf32> to vector<32x64xf32>
    %5 = arith.addf %2, %4 : vector<32x64xf32>
    %cst_5 = arith.constant 0.00999999977 : f32
    %6 = vector.broadcast %cst_5 : f32 to vector<32x64xf32>
    %7 = arith.mulf %6, %5 : vector<32x64xf32>
    %8 = arith.maximumf %5, %7 : vector<32x64xf32>
    %c0_6 = arith.constant 0 : index
    %c0_7 = arith.constant 0 : index
    %9 = vector.load %arg4[%c0_6, %c0_7] : memref<64x64xf32, #tpu.memory_space<vmem>>, vector<64x64xf32>
    %cst_8 = arith.constant dense<0.000000e+00> : vector<32x64xf32>
    %10 = tpu.matmul %8, %9, %cst_8 {dimension_numbers = #tpu.dot_dimension_numbers<[1], [0], [0], [1], [0, 0, 1, 1], [], []>} : vector<32x64xf32>, vector<64x64xf32>, vector<32x64xf32> -> vector<32x64xf32>
    %c0_9 = arith.constant 0 : index
    %c0_10 = arith.constant 0 : index
    %11 = vector.load %arg5[%c0_9, %c0_10] : memref<1x64xf32, #tpu.memory_space<vmem>>, vector<1x64xf32>
    %12 = vector.broadcast %11 : vector<1x64xf32> to vector<32x64xf32>
    %13 = arith.addf %10, %12 : vector<32x64xf32>
    %cst_11 = arith.constant 0.00999999977 : f32
    %14 = vector.broadcast %cst_11 : f32 to vector<32x64xf32>
    %15 = arith.mulf %14, %13 : vector<32x64xf32>
    %16 = arith.maximumf %13, %15 : vector<32x64xf32>
    %c0_12 = arith.constant 0 : index
    %c0_13 = arith.constant 0 : index
    %17 = vector.load %arg6[%c0_12, %c0_13] : memref<64x1xf32, #tpu.memory_space<vmem>>, vector<64x1xf32>
    %cst_14 = arith.constant dense<0.000000e+00> : vector<32x1xf32>
    %18 = tpu.matmul %16, %17, %cst_14 {dimension_numbers = #tpu.dot_dimension_numbers<[1], [0], [0], [1], [0, 0, 1, 1], [], []>} : vector<32x64xf32>, vector<64x1xf32>, vector<32x1xf32> -> vector<32x1xf32>
    %c0_15 = arith.constant 0 : index
    %c0_16 = arith.constant 0 : index
    %19 = vector.load %arg7[%c0_15, %c0_16] : memref<1x1xf32, #tpu.memory_space<vmem>>, vector<1x1xf32>
    %20 = vector.broadcast %19 : vector<1x1xf32> to vector<32x1xf32>
    %21 = arith.addf %18, %20 : vector<32x1xf32>
    %c0_17 = arith.constant 0 : index
    %c0_18 = arith.constant 0 : index
    %22 = vector.load %arg8[%c0_17, %c0_18] : memref<32x1xf32, #tpu.memory_space<vmem>>, vector<32x1xf32>
    tpu.vector_store %arg8[%c0_17, %c0_18], %21 {strides = array<i32>} : memref<32x1xf32, #tpu.memory_space<vmem>>, vector<32x1xf32>,
    return
  }
  func.func @transform_0(%arg0: i32) -> (i32, i32) {
    %c0_i32 = arith.constant 0 : i32
    %c0_i32_0 = arith.constant 0 : i32
    return %arg0, %c0_i32 : i32, i32
  }
  func.func @transform_1(%arg0: i32) -> (i32, i32) {
    %c0_i32 = arith.constant 0 : i32
    %c0_i32_0 = arith.constant 0 : i32
    %c0_i32_1 = arith.constant 0 : i32
    return %c0_i32, %c0_i32_0 : i32, i32
  }
  func.func @transform_2(%arg0: i32) -> (i32, i32) {
    %c0_i32 = arith.constant 0 : i32
    %c0_i32_0 = arith.constant 0 : i32
    %c0_i32_1 = arith.constant 0 : i32
    return %c0_i32, %c0_i32_0 : i32, i32
  }
  func.func @transform_3(%arg0: i32) -> (i32, i32) {
    %c0_i32 = arith.constant 0 : i32
    %c0_i32_0 = arith.constant 0 : i32
    %c0_i32_1 = arith.constant 0 : i32
    return %c0_i32, %c0_i32_0 : i32, i32
  }
  func.func @transform_4(%arg0: i32) -> (i32, i32) {
    %c0_i32 = arith.constant 0 : i32
    %c0_i32_0 = arith.constant 0 : i32
    %c0_i32_1 = arith.constant 0 : i32
    return %c0_i32, %c0_i32_0 : i32, i32
  }
  func.func @transform_5(%arg0: i32) -> (i32, i32) {
    %c0_i32 = arith.constant 0 : i32
    %c0_i32_0 = arith.constant 0 : i32
    %c0_i32_1 = arith.constant 0 : i32
    return %c0_i32, %c0_i32_0 : i32, i32
  }
  func.func @transform_6(%arg0: i32) -> (i32, i32) {
    %c0_i32 = arith.constant 0 : i32
    %c0_i32_0 = arith.constant 0 : i32
    %c0_i32_1 = arith.constant 0 : i32
    return %c0_i32, %c0_i32_0 : i32, i32
  }
  func.func @transform_7(%arg0: i32) -> (i32, i32) {
    %c0_i32 = arith.constant 0 : i32
    %c0_i32_0 = arith.constant 0 : i32
    return %arg0, %c0_i32 : i32, i32
  }
}

module attributes {stable_mosaic.version = 11 : i64} {
  func.func @_expr_decoder_kernel(%arg0: i32, %arg1: memref<32x64xf32, #tpu.memory_space<vmem>>, %arg2: memref<64x64xf32, #tpu.memory_space<vmem>>, %arg3: memref<1x64xf32, #tpu.memory_space<vmem>>, %arg4: memref<64x64xf32, #tpu.memory_space<vmem>>, %arg5: memref<1x64xf32, #tpu.memory_space<vmem>>, %arg6: memref<64x1xf32, #tpu.memory_space<vmem>>, %arg7: memref<1x1xf32, #tpu.memory_space<vmem>>, %arg8: memref<32x1xf32, #tpu.memory_space<vmem>>) attributes {dimension_semantics = [#tpu.dimension_semantics<parallel>], iteration_bounds = array<i64: 1>, scalar_prefetch = 0 : i64, scratch_operands = 0 : i64, tpu.core_type = #tpu.core_type<tc>, window_params = [{transform_indices = @transform_0, window_bounds = array<i64: 32, 64>}, {pipeline_mode = #tpu.pipeline_mode<synchronous>, transform_indices = @transform_1, window_bounds = array<i64: 64, 64>}, {pipeline_mode = #tpu.pipeline_mode<synchronous>, transform_indices = @transform_2, window_bounds = array<i64: 1, 64>}, {pipeline_mode = #tpu.pipeline_mode<synchronous>, transform_indices = @transform_3, window_bounds = array<i64: 64, 64>}, {pipeline_mode = #tpu.pipeline_mode<synchronous>, transform_indices = @transform_4, window_bounds = array<i64: 1, 64>}, {pipeline_mode = #tpu.pipeline_mode<synchronous>, transform_indices = @transform_5, window_bounds = array<i64: 64, 1>}, {pipeline_mode = #tpu.pipeline_mode<synchronous>, transform_indices = @transform_6, window_bounds = array<i64: 1, 1>}, {transform_indices = @transform_7, window_bounds = array<i64: 32, 1>}]} {
    %c0 = arith.constant 0 : index
    %c0_0 = arith.constant 0 : index
    %0 = vector.load %arg1[%c0, %c0_0] : memref<32x64xf32, #tpu.memory_space<vmem>>, vector<32x64xf32>
    %c0_1 = arith.constant 0 : index
    %c0_2 = arith.constant 0 : index
    %1 = vector.load %arg2[%c0_1, %c0_2] : memref<64x64xf32, #tpu.memory_space<vmem>>, vector<64x64xf32>
    %cst = arith.constant dense<0.000000e+00> : vector<32x64xf32>
    %2 = tpu.matmul %0, %1, %cst {dimension_numbers = #tpu.dot_dimension_numbers<[1], [0], [0], [1], [0, 0, 1, 1], [], []>} : vector<32x64xf32>, vector<64x64xf32>, vector<32x64xf32> -> vector<32x64xf32>
    %c0_3 = arith.constant 0 : index
    %c0_4 = arith.constant 0 : index
    %3 = vector.load %arg3[%c0_3, %c0_4] : memref<1x64xf32, #tpu.memory_space<vmem>>, vector<1x64xf32>
    %4 = vector.broadcast %3 : vector<1x64xf32> to vector<32x64xf32>
    %5 = arith.addf %2, %4 : vector<32x64xf32>
    %cst_5 = arith.constant 0.00999999977 : f32
    %6 = vector.broadcast %cst_5 : f32 to vector<32x64xf32>
    %7 = arith.mulf %6, %5 : vector<32x64xf32>
    %8 = arith.maximumf %5, %7 : vector<32x64xf32>
    %c0_6 = arith.constant 0 : index
    %c0_7 = arith.constant 0 : index
    %9 = vector.load %arg4[%c0_6, %c0_7] : memref<64x64xf32, #tpu.memory_space<vmem>>, vector<64x64xf32>
    %cst_8 = arith.constant dense<0.000000e+00> : vector<32x64xf32>
    %10 = tpu.matmul %8, %9, %cst_8 {dimension_numbers = #tpu.dot_dimension_numbers<[1], [0], [0], [1], [0, 0, 1, 1], [], []>} : vector<32x64xf32>, vector<64x64xf32>, vector<32x64xf32> -> vector<32x64xf32>
    %c0_9 = arith.constant 0 : index
    %c0_10 = arith.constant 0 : index
    %11 = vector.load %arg5[%c0_9, %c0_10] : memref<1x64xf32, #tpu.memory_space<vmem>>, vector<1x64xf32>
    %12 = vector.broadcast %11 : vector<1x64xf32> to vector<32x64xf32>
    %13 = arith.addf %10, %12 : vector<32x64xf32>
    %cst_11 = arith.constant 0.00999999977 : f32
    %14 = vector.broadcast %cst_11 : f32 to vector<32x64xf32>
    %15 = arith.mulf %14, %13 : vector<32x64xf32>
    %16 = arith.maximumf %13, %15 : vector<32x64xf32>
    %c0_12 = arith.constant 0 : index
    %c0_13 = arith.constant 0 : index
    %17 = vector.load %arg6[%c0_12, %c0_13] : memref<64x1xf32, #tpu.memory_space<vmem>>, vector<64x1xf32>
    %cst_14 = arith.constant dense<0.000000e+00> : vector<32x1xf32>
    %18 = tpu.matmul %16, %17, %cst_14 {dimension_numbers = #tpu.dot_dimension_numbers<[1], [0], [0], [1], [0, 0, 1, 1], [], []>} : vector<32x64xf32>, vector<64x1xf32>, vector<32x1xf32> -> vector<32x1xf32>
    %c0_15 = arith.constant 0 : index
    %c0_16 = arith.constant 0 : index
    %19 = vector.load %arg7[%c0_15, %c0_16] : memref<1x1xf32, #tpu.memory_space<vmem>>, vector<1x1xf32>
    %20 = vector.broadcast %19 : vector<1x1xf32> to vector<32x1xf32>
    %21 = arith.addf %18, %20 : vector<32x1xf32>
    %c0_17 = arith.constant 0 : index
    %c0_18 = arith.constant 0 : index
    %22 = vector.load %arg8[%c0_17, %c0_18] : memref<32x1xf32, #tpu.memory_space<vmem>>, vector<32x1xf32>
    tpu.vector_store %arg8[%c0_17, %c0_18], %21 {strides = array<i32>} : memref<32x1xf32, #tpu.memory_space<vmem>>, vector<32x1xf32>,
    return
  }
  func.func @transform_0(%arg0: i32) -> (i32, i32) {
    %c0_i32 = arith.constant 0 : i32
    %c0_i32_0 = arith.constant 0 : i32
    return %arg0, %c0_i32 : i32, i32
  }
  func.func @transform_1(%arg0: i32) -> (i32, i32) {
    %c0_i32 = arith.constant 0 : i32
    %c0_i32_0 = arith.constant 0 : i32
    %c0_i32_1 = arith.constant 0 : i32
    return %c0_i32, %c0_i32_0 : i32, i32
  }
  func.func @transform_2(%arg0: i32) -> (i32, i32) {
    %c0_i32 = arith.constant 0 : i32
    %c0_i32_0 = arith.constant 0 : i32
    %c0_i32_1 = arith.constant 0 : i32
    return %c0_i32, %c0_i32_0 : i32, i32
  }
  func.func @transform_3(%arg0: i32) -> (i32, i32) {
    %c0_i32 = arith.constant 0 : i32
    %c0_i32_0 = arith.constant 0 : i32
    %c0_i32_1 = arith.constant 0 : i32
    return %c0_i32, %c0_i32_0 : i32, i32
  }
  func.func @transform_4(%arg0: i32) -> (i32, i32) {
    %c0_i32 = arith.constant 0 : i32
    %c0_i32_0 = arith.constant 0 : i32
    %c0_i32_1 = arith.constant 0 : i32
    return %c0_i32, %c0_i32_0 : i32, i32
  }
  func.func @transform_5(%arg0: i32) -> (i32, i32) {
    %c0_i32 = arith.constant 0 : i32
    %c0_i32_0 = arith.constant 0 : i32
    %c0_i32_1 = arith.constant 0 : i32
    return %c0_i32, %c0_i32_0 : i32, i32
  }
  func.func @transform_6(%arg0: i32) -> (i32, i32) {
    %c0_i32 = arith.constant 0 : i32
    %c0_i32_0 = arith.constant 0 : i32
    %c0_i32_1 = arith.constant 0 : i32
    return %c0_i32, %c0_i32_0 : i32, i32
  }
  func.func @transform_7(%arg0: i32) -> (i32, i32) {
    %c0_i32 = arith.constant 0 : i32
    %c0_i32_0 = arith.constant 0 : i32
    return %arg0, %c0_i32 : i32, i32
  }
}

</mosaic_0001>

<llo_original>
// kernel: tpu_custom_call.1
$region0: #{tpu_custom_call.1}
  #allocation0 [shape = 'u32[]', space=smem, size = 0x4, offset = 0x4, fixed_abs, tag = 'smem constant byte address 0x4 - core index']
  #allocation1 [shape = 'u32[144,128]{1,0:T(1,128)}', space=vmem, size = 0x12000, scoped, tag = 'internal scratch']
  #allocation2 [shape = 'f32[1,1]{1,0:T(1,128)S(1)}', space=vmem, size = 0x200, scoped, tag = 'scoped memory for tpu_custom_call.1']
  %s0 = inlined_call_operand.hbm [shape: f32[32,64], index: 0, kind: input, shape index: {}]
  %s1 = inlined_call_operand.vmem [shape: f32[64,64], index: 1, kind: input, shape index: {}]
  %s2 = inlined_call_operand.vmem [shape: f32[1,64], index: 2, kind: input, shape index: {}]
  %s3 = inlined_call_operand.hbm [shape: f32[64,64], index: 3, kind: input, shape index: {}]
  %s4 = inlined_call_operand.vmem [shape: f32[1,64], index: 4, kind: input, shape index: {}]
  %s5 = inlined_call_operand.vmem [shape: f32[64,1], index: 5, kind: input, shape index: {}]
  %s6 = inlined_call_operand.<no memory space> [shape: f32[1,1], index: 6, kind: input, shape index: {}]
  %s7 = inlined_call_operand.vmem [shape: f32[32,1], index: 7, kind: output, shape index: {}]
  %s8 = sld [smem:[#allocation0]]
  $region46: #{tpu_custom_call.1} parent=0
    _
  %s10 = ssub.s32 1, %s8
  %s11 = scalar_select 0, %s10, %s8
  %v12 = vstv %s6
  %13 = vst [vmem:[#allocation2] sm:$0x1] %v12
  $region1: #{tpu_custom_call.1} parent=0
    #allocation3 [shape = 'u8[16384]{0}', space=vmem, size = 0x4000, scoped, tag = 'input window, operand 0, single buffered']
    #allocation4 [shape = 's32[1]{0}', space=sflag, size = 0x4, scoped, tag = 'scoped memory for tpu_custom_call.1']
    #allocation5 [shape = 'u8[32768]{0}', space=vmem, size = 0x8000, scoped, tag = 'input window, operand 3, single buffered']
    #allocation6 [shape = 's32[1]{0}', space=sflag, size = 0x4, scoped, tag = 'scoped memory for tpu_custom_call.1']
    %14 = vsyncpa [#allocation4], 0
    %15 = vsyncpa [#allocation6], 0
    // Predicated region
    $region2: #{tpu_custom_call.1} parent=1 // pred_check
      _
    $region3: #{tpu_custom_call.1} parent=1 // pred_check_branch
      %17 = sbr.rel (0) target = $region5
    $region4: #{tpu_custom_call.1} parent=1 // pred_region
      %s19 = ssub.s32 512, 512
      %20 = vsyncadd [#allocation4], %s19
      %s21 = sshll.u32 [#allocation3], 4
      %s22 = int_to_ptr.vmem [resolvable:$true] %s21
      %27 = dma.hbm_to_vmem [thread:$0]  %s0, 512, %s22, [#allocation4], 128, 128, 8
    $region5: #{tpu_custom_call.1} parent=1 // pred_fallthru
      _
    // Predicated region
    $region6: #{tpu_custom_call.1} parent=1 // pred_check
      _
    $region7: #{tpu_custom_call.1} parent=1 // pred_check_branch
      %29 = sbr.rel (0) target = $region9
    $region8: #{tpu_custom_call.1} parent=1 // pred_region
      _
    $region9: #{tpu_custom_call.1} parent=1 // pred_fallthru
      _
    // Predicated region
    $region10: #{tpu_custom_call.1} parent=1 // pred_check
      _
    $region11: #{tpu_custom_call.1} parent=1 // pred_check_branch
      %31 = sbr.rel (0) target = $region13
    $region12: #{tpu_custom_call.1} parent=1 // pred_region
      _
    $region13: #{tpu_custom_call.1} parent=1 // pred_fallthru
      _
    // Predicated region
    $region14: #{tpu_custom_call.1} parent=1 // pred_check
      _
    $region15: #{tpu_custom_call.1} parent=1 // pred_check_branch
      %33 = sbr.rel (0) target = $region17
    $region16: #{tpu_custom_call.1} parent=1 // pred_region
      %s35 = ssub.s32 1024, 1024
      %36 = vsyncadd [#allocation6], %s35
      %s37 = sshll.u32 [#allocation5], 4
      %s38 = int_to_ptr.vmem [resolvable:$true] %s37
      %43 = dma.hbm_to_vmem [thread:$0]  %s3, 1024, %s38, [#allocation6], 128, 128, 8
    $region17: #{tpu_custom_call.1} parent=1 // pred_fallthru
      _
    // Predicated region
    $region18: #{tpu_custom_call.1} parent=1 // pred_check
      _
    $region19: #{tpu_custom_call.1} parent=1 // pred_check_branch
      %45 = sbr.rel (0) target = $region21
    $region20: #{tpu_custom_call.1} parent=1 // pred_region
      _
    $region21: #{tpu_custom_call.1} parent=1 // pred_fallthru
      _
    // Predicated region
    $region22: #{tpu_custom_call.1} parent=1 // pred_check
      _
    $region23: #{tpu_custom_call.1} parent=1 // pred_check_branch
      %47 = sbr.rel (0) target = $region25
    $region24: #{tpu_custom_call.1} parent=1 // pred_region
      _
    $region25: #{tpu_custom_call.1} parent=1 // pred_fallthru
      _
    // Predicated region
    $region26: #{tpu_custom_call.1} parent=1 // pred_check
      _
    $region27: #{tpu_custom_call.1} parent=1 // pred_check_branch
      %49 = sbr.rel (0) target = $region29
    $region28: #{tpu_custom_call.1} parent=1 // pred_region
      _
    $region29: #{tpu_custom_call.1} parent=1 // pred_fallthru
      _
    // Predicated region
    $region30: #{tpu_custom_call.1} parent=1 // pred_check
      _
    $region31: #{tpu_custom_call.1} parent=1 // pred_check_branch
      %51 = sbr.rel (0) target = $region33
    $region32: #{tpu_custom_call.1} parent=1 // pred_region
      %52 = dma.done [#allocation4], 512
    $region33: #{tpu_custom_call.1} parent=1 // pred_fallthru
      _
    // Predicated region
    $region34: #{tpu_custom_call.1} parent=1 // pred_check
      _
    $region35: #{tpu_custom_call.1} parent=1 // pred_check_branch
      %54 = sbr.rel (0) target = $region37
    $region36: #{tpu_custom_call.1} parent=1 // pred_region
      %55 = dma.done [#allocation6], 1024
    $region37: #{tpu_custom_call.1} parent=1 // pred_fallthru
      _
    %v56 = vld [vmem:[#allocation3] sm:$0xff]
    %v57 = vld [vmem:[#allocation3 + $0x8] sm:$0xff]
    %v58 = vld [vmem:[#allocation3 + $0x10] sm:$0xff]
    %v59 = vld [vmem:[#allocation3 + $0x18] sm:$0xff]
    %v60 = vld [vmem:[%s1] sm:$0xff]
    %v61 = vld [vmem:[%s1 + $0x8] sm:$0xff]
    %v62 = vld [vmem:[%s1 + $0x10] sm:$0xff]
    %v63 = vld [vmem:[%s1 + $0x18] sm:$0xff]
    %v64 = vld [vmem:[%s1 + $0x20] sm:$0xff]
    %v65 = vld [vmem:[%s1 + $0x28] sm:$0xff]
    %v66 = vld [vmem:[%s1 + $0x30] sm:$0xff]
    %v67 = vld [vmem:[%s1 + $0x38] sm:$0xff]
    %v68 = vld [vmem:[%s2] sm:$0x1]
    %v70 = vlaneseq
    %v71 = vshrl.u32 %v70, 7
    %v72 = vsub.s32 0, %v71
    %v73 = vrot.slane %v68, %v72
    %vm75 = vcmask 523264
    %v77 = vsel %vm75, %v56, 0
    %v80 = vsel %vm75, %v57, 0
    %v83 = vsel %vm75, %v58, 0
    %v86 = vsel %vm75, %v59, 0
    %88 = vmatprep.subr.mxu0 0.0
    %89 = vmatpush1.msra.mxu0 %v60
    %90 = vmatprep.subr.mxu0 0.0
    %91 = vmatpush1.msra.mxu0 %v61
    %92 = vmatprep.subr.mxu0 0.0
    %93 = vmatpush1.msra.mxu0 %v62
    %94 = vmatprep.subr.mxu0 0.0
    %95 = vmatpush1.msra.mxu0 %v63
    %96 = vmatprep.subr.mxu0 0.0
    %97 = vmatpush1.msra.mxu0 %v64
    %98 = vmatprep.subr.mxu0 0.0
    %99 = vmatpush1.msra.mxu0 %v65
    %100 = vmatprep.subr.mxu0 0.0
    %101 = vmatpush1.msra.mxu0 %v66
    %102 = vmatprep.subr.mxu0 0.0
    %103 = vmatpush1.msra.mxu0 %v67
    %104 = vmatprep.subr.mxu0 0.0
    %105 = vmatpush1.msra.mxu0 0.0
    %106 = vmatprep.subr.mxu0 0.0
    %107 = vmatpush1.msra.mxu0 0.0
    %108 = vmatprep.subr.mxu0 0.0
    %109 = vmatpush1.msra.mxu0 0.0
    %110 = vmatprep.subr.mxu0 0.0
    %111 = vmatpush1.msra.mxu0 0.0
    %112 = vmatprep.subr.mxu0 0.0
    %113 = vmatpush1.msra.mxu0 0.0
    %114 = vmatprep.subr.mxu0 0.0
    %115 = vmatpush1.msra.mxu0 0.0
    %116 = vmatprep.subr.mxu0 0.0
    %117 = vmatpush1.msra.mxu0 0.0
    %118 = vmatprep.subr.mxu0 0.0
    %119 = vmatpush1.msra.mxu0 0.0
    %120 = vmatprep.subr.mxu0 0.0
    %121 = vmatpush1.msra.mxu0 0.0
    %122 = vmatprep.subr.mxu0 0.0
    %123 = vmatpush1.msra.mxu0 0.0
    %124 = vmatprep.subr.mxu0 0.0
    %125 = vmatpush1.msra.mxu0 0.0
    %126 = vmatprep.subr.mxu0 0.0
    %127 = vmatpush1.msra.mxu0 0.0
    %128 = vmatprep.subr.mxu0 0.0
    %129 = vmatpush1.msra.mxu0 0.0
    %130 = vmatprep.subr.mxu0 0.0
    %131 = vmatpush1.msra.mxu0 0.0
    %132 = vmatprep.subr.mxu0 0.0
    %133 = vmatpush1.msra.mxu0 0.0
    %134 = vmatprep.subr.mxu0 0.0
    %135 = vmatpush1.msra.mxu0 0.0
    %136 = vmatprep.subr.mxu0 0.0
    %137 = vmatpush1.msra.mxu0 0.0
    %138 = vmatprep.subr.mxu0 0.0
    %139 = vmatpush1.msra.mxu0 0.0
    %140 = vmatprep.subr.mxu0 0.0
    %141 = vmatpush1.msra.mxu0 0.0
    %142 = vmatprep.subr.mxu0 0.0
    %143 = vmatpush1.msra.mxu0 0.0
    %144 = vmatprep.subr.mxu0 0.0
    %145 = vmatpush1.msra.mxu0 0.0
    %146 = vmatprep.subr.mxu0 0.0
    %147 = vmatpush1.msra.mxu0 0.0
    %148 = vmatprep.subr.mxu0 0.0
    %149 = vmatpush1.msra.mxu0 0.0
    %150 = vmatprep.subr.mxu0 0.0
    %151 = vmatpush1.msra.mxu0 0.0
    %152 = vmatprep.mubr.f32.mxu0 0.0
    %153 = vmatmul.mubr.f32.gmra.mrb[0].mxu0 %v77
    %v154 = vpop.f32.mrb[0].mxu0
    %v155 = vadd.f32 %v73, %v154
    %v156 = vpop.f32.mrb[0].mxu0
    %157 = vmatprep.mubr.f32.mxu0 0.0
    %158 = vmatmul.mubr.f32.gmra.mrb[0].mxu0 %v80
    %v159 = vpop.f32.mrb[0].mxu0
    %v160 = vadd.f32 %v73, %v159
    %v161 = vpop.f32.mrb[0].mxu0
    %162 = vmatprep.mubr.f32.mxu0 0.0
    %163 = vmatmul.mubr.f32.gmra.mrb[0].mxu0 %v83
    %v164 = vpop.f32.mrb[0].mxu0
    %v165 = vadd.f32 %v73, %v164
    %v166 = vpop.f32.mrb[0].mxu0
    %167 = vmatprep.mubr.f32.mxu0 0.0
    %168 = vmatmul.mubr.f32.gmra.mrb[0].mxu0 %v86
    %v169 = vpop.f32.mrb[0].mxu0
    %v170 = vadd.f32 %v73, %v169
    %v171 = vpop.f32.mrb[0].mxu0
    %172 = vdwg.mxu0
    %v173 = vmul.f32 %v155, 0.01
    %v174 = vmul.f32 %v160, 0.01
    %v175 = vmul.f32 %v165, 0.01
    %v176 = vmul.f32 %v170, 0.01
    %v177 = vmax.f32 %v155, %v173
    %v178 = vmax.f32 %v160, %v174
    %v179 = vmax.f32 %v165, %v175
    %v180 = vmax.f32 %v170, %v176
    %v181 = vld [vmem:[#allocation5] sm:$0xff]
    %v182 = vld [vmem:[#allocation5 + $0x8] sm:$0xff]
    %v183 = vld [vmem:[#allocation5 + $0x10] sm:$0xff]
    %v184 = vld [vmem:[#allocation5 + $0x18] sm:$0xff]
    %v185 = vld [vmem:[#allocation5 + $0x20] sm:$0xff]
    %v186 = vld [vmem:[#allocation5 + $0x28] sm:$0xff]
    %v187 = vld [vmem:[#allocation5 + $0x30] sm:$0xff]
    %v188 = vld [vmem:[#allocation5 + $0x38] sm:$0xff]
    %v189 = vld [vmem:[%s4] sm:$0x1]
    %v191 = vlaneseq
    %v192 = vshrl.u32 %v191, 7
    %v193 = vsub.s32 0, %v192
    %v194 = vrot.slane %v189, %v193
    %v197 = vsel %vm75, %v177, 0
    %v200 = vsel %vm75, %v178, 0
    %v203 = vsel %vm75, %v179, 0
    %v206 = vsel %vm75, %v180, 0
    %208 = vmatprep.subr.mxu0 0.0
    %209 = vmatpush1.msra.mxu0 %v181
    %210 = vmatprep.subr.mxu0 0.0
    %211 = vmatpush1.msra.mxu0 %v182
    %212 = vmatprep.subr.mxu0 0.0
    %213 = vmatpush1.msra.mxu0 %v183
    %214 = vmatprep.subr.mxu0 0.0
    %215 = vmatpush1.msra.mxu0 %v184
    %216 = vmatprep.subr.mxu0 0.0
    %217 = vmatpush1.msra.mxu0 %v185
    %218 = vmatprep.subr.mxu0 0.0
    %219 = vmatpush1.msra.mxu0 %v186
    %220 = vmatprep.subr.mxu0 0.0
    %221 = vmatpush1.msra.mxu0 %v187
    %222 = vmatprep.subr.mxu0 0.0
    %223 = vmatpush1.msra.mxu0 %v188
    %224 = vmatprep.subr.mxu0 0.0
    %225 = vmatpush1.msra.mxu0 0.0
    %226 = vmatprep.subr.mxu0 0.0
    %227 = vmatpush1.msra.mxu0 0.0
    %228 = vmatprep.subr.mxu0 0.0
    %229 = vmatpush1.msra.mxu0 0.0
    %230 = vmatprep.subr.mxu0 0.0
    %231 = vmatpush1.msra.mxu0 0.0
    %232 = vmatprep.subr.mxu0 0.0
    %233 = vmatpush1.msra.mxu0 0.0
    %234 = vmatprep.subr.mxu0 0.0
    %235 = vmatpush1.msra.mxu0 0.0
    %236 = vmatprep.subr.mxu0 0.0
    %237 = vmatpush1.msra.mxu0 0.0
    %238 = vmatprep.subr.mxu0 0.0
    %239 = vmatpush1.msra.mxu0 0.0
    %240 = vmatprep.subr.mxu0 0.0
    %241 = vmatpush1.msra.mxu0 0.0
    %242 = vmatprep.subr.mxu0 0.0
    %243 = vmatpush1.msra.mxu0 0.0
    %244 = vmatprep.subr.mxu0 0.0
    %245 = vmatpush1.msra.mxu0 0.0
    %246 = vmatprep.subr.mxu0 0.0
    %247 = vmatpush1.msra.mxu0 0.0
    %248 = vmatprep.subr.mxu0 0.0
    %249 = vmatpush1.msra.mxu0 0.0
    %250 = vmatprep.subr.mxu0 0.0
    %251 = vmatpush1.msra.mxu0 0.0
    %252 = vmatprep.subr.mxu0 0.0
    %253 = vmatpush1.msra.mxu0 0.0
    %254 = vmatprep.subr.mxu0 0.0
    %255 = vmatpush1.msra.mxu0 0.0
    %256 = vmatprep.subr.mxu0 0.0
    %257 = vmatpush1.msra.mxu0 0.0
    %258 = vmatprep.subr.mxu0 0.0
    %259 = vmatpush1.msra.mxu0 0.0
    %260 = vmatprep.subr.mxu0 0.0
    %261 = vmatpush1.msra.mxu0 0.0
    %262 = vmatprep.subr.mxu0 0.0
    %263 = vmatpush1.msra.mxu0 0.0
    %264 = vmatprep.subr.mxu0 0.0
    %265 = vmatpush1.msra.mxu0 0.0
    %266 = vmatprep.subr.mxu0 0.0
    %267 = vmatpush1.msra.mxu0 0.0
    %268 = vmatprep.subr.mxu0 0.0
    %269 = vmatpush1.msra.mxu0 0.0
    %270 = vmatprep.subr.mxu0 0.0
    %271 = vmatpush1.msra.mxu0 0.0
    %272 = vmatprep.mubr.f32.mxu0 0.0
    %273 = vmatmul.mubr.f32.gmra.mrb[0].mxu0 %v197
    %v274 = vpop.f32.mrb[0].mxu0
    %v275 = vadd.f32 %v194, %v274
    %v276 = vpop.f32.mrb[0].mxu0
    %277 = vmatprep.mubr.f32.mxu0 0.0
    %278 = vmatmul.mubr.f32.gmra.mrb[0].mxu0 %v200
    %v279 = vpop.f32.mrb[0].mxu0
    %v280 = vadd.f32 %v194, %v279
    %v281 = vpop.f32.mrb[0].mxu0
    %282 = vmatprep.mubr.f32.mxu0 0.0
    %283 = vmatmul.mubr.f32.gmra.mrb[0].mxu0 %v203
    %v284 = vpop.f32.mrb[0].mxu0
    %v285 = vadd.f32 %v194, %v284
    %v286 = vpop.f32.mrb[0].mxu0
    %287 = vmatprep.mubr.f32.mxu0 0.0
    %288 = vmatmul.mubr.f32.gmra.mrb[0].mxu0 %v206
    %v289 = vpop.f32.mrb[0].mxu0
    %v290 = vadd.f32 %v194, %v289
    %v291 = vpop.f32.mrb[0].mxu0
    %292 = vdwg.mxu0
    %v293 = vmul.f32 %v275, 0.01
    %v294 = vmul.f32 %v280, 0.01
    %v295 = vmul.f32 %v285, 0.01
    %v296 = vmul.f32 %v290, 0.01
    %v297 = vmax.f32 %v275, %v293
    %v298 = vmax.f32 %v280, %v294
    %v299 = vmax.f32 %v285, %v295
    %v300 = vmax.f32 %v290, %v296
    %v301 = vld [vmem:[%s5] sm:$0xff]
    %v302 = vld [vmem:[%s5 + $0x8] sm:$0xff]
    %v303 = vld [vmem:[%s5 + $0x10] sm:$0xff]
    %v304 = vld [vmem:[%s5 + $0x18] sm:$0xff]
    %v305 = vld [vmem:[%s5 + $0x20] sm:$0xff]
    %v306 = vld [vmem:[%s5 + $0x28] sm:$0xff]
    %v307 = vld [vmem:[%s5 + $0x30] sm:$0xff]
    %v308 = vld [vmem:[%s5 + $0x38] sm:$0xff]
    %v309 = vld [vmem:[#allocation2] sm:$0x1]
    %v311 = vlaneseq
    %v312 = vshrl.u32 %v311, 7
    %v313 = vsub.s32 0, %v312
    %v314 = vrot.slane %v309, %v313
    %v317 = vsel %vm75, %v297, 0
    %v320 = vsel %vm75, %v298, 0
    %v323 = vsel %vm75, %v299, 0
    %v326 = vsel %vm75, %v300, 0
    %328 = vmatprep.subr.mxu0 0.0
    %329 = vmatpush1.msra.mxu0 %v301
    %330 = vmatprep.subr.mxu0 0.0
    %331 = vmatpush1.msra.mxu0 %v302
    %332 = vmatprep.subr.mxu0 0.0
    %333 = vmatpush1.msra.mxu0 %v303
    %334 = vmatprep.subr.mxu0 0.0
    %335 = vmatpush1.msra.mxu0 %v304
    %336 = vmatprep.subr.mxu0 0.0
    %337 = vmatpush1.msra.mxu0 %v305
    %338 = vmatprep.subr.mxu0 0.0
    %339 = vmatpush1.msra.mxu0 %v306
    %340 = vmatprep.subr.mxu0 0.0
    %341 = vmatpush1.msra.mxu0 %v307
    %342 = vmatprep.subr.mxu0 0.0
    %343 = vmatpush1.msra.mxu0 %v308
    %344 = vmatprep.subr.mxu0 0.0
    %345 = vmatpush1.msra.mxu0 0.0
    %346 = vmatprep.subr.mxu0 0.0
    %347 = vmatpush1.msra.mxu0 0.0
    %348 = vmatprep.subr.mxu0 0.0
    %349 = vmatpush1.msra.mxu0 0.0
    %350 = vmatprep.subr.mxu0 0.0
    %351 = vmatpush1.msra.mxu0 0.0
    %352 = vmatprep.subr.mxu0 0.0
    %353 = vmatpush1.msra.mxu0 0.0
    %354 = vmatprep.subr.mxu0 0.0
    %355 = vmatpush1.msra.mxu0 0.0
    %356 = vmatprep.subr.mxu0 0.0
    %357 = vmatpush1.msra.mxu0 0.0
    %358 = vmatprep.subr.mxu0 0.0
    %359 = vmatpush1.msra.mxu0 0.0
    %360 = vmatprep.subr.mxu0 0.0
    %361 = vmatpush1.msra.mxu0 0.0
    %362 = vmatprep.subr.mxu0 0.0
    %363 = vmatpush1.msra.mxu0 0.0
    %364 = vmatprep.subr.mxu0 0.0
    %365 = vmatpush1.msra.mxu0 0.0
    %366 = vmatprep.subr.mxu0 0.0
    %367 = vmatpush1.msra.mxu0 0.0
    %368 = vmatprep.subr.mxu0 0.0
    %369 = vmatpush1.msra.mxu0 0.0
    %370 = vmatprep.subr.mxu0 0.0
    %371 = vmatpush1.msra.mxu0 0.0
    %372 = vmatprep.subr.mxu0 0.0
    %373 = vmatpush1.msra.mxu0 0.0
    %374 = vmatprep.subr.mxu0 0.0
    %375 = vmatpush1.msra.mxu0 0.0
    %376 = vmatprep.subr.mxu0 0.0
    %377 = vmatpush1.msra.mxu0 0.0
    %378 = vmatprep.subr.mxu0 0.0
    %379 = vmatpush1.msra.mxu0 0.0
    %380 = vmatprep.subr.mxu0 0.0
    %381 = vmatpush1.msra.mxu0 0.0
    %382 = vmatprep.subr.mxu0 0.0
    %383 = vmatpush1.msra.mxu0 0.0
    %384 = vmatprep.subr.mxu0 0.0
    %385 = vmatpush1.msra.mxu0 0.0
    %386 = vmatprep.subr.mxu0 0.0
    %387 = vmatpush1.msra.mxu0 0.0
    %388 = vmatprep.subr.mxu0 0.0
    %389 = vmatpush1.msra.mxu0 0.0
    %390 = vmatprep.subr.mxu0 0.0
    %391 = vmatpush1.msra.mxu0 0.0
    %392 = vmatprep.mubr.f32.mxu0 0.0
    %393 = vmatmul.mubr.f32.gmra.mrb[0].mxu0 %v317
    %v394 = vpop.f32.mrb[0].mxu0
    %v395 = vadd.f32 %v314, %v394
    %v396 = vpop.f32.mrb[0].mxu0
    %397 = vmatprep.mubr.f32.mxu0 0.0
    %398 = vmatmul.mubr.f32.gmra.mrb[0].mxu0 %v320
    %v399 = vpop.f32.mrb[0].mxu0
    %v400 = vadd.f32 %v314, %v399
    %v401 = vpop.f32.mrb[0].mxu0
    %402 = vmatprep.mubr.f32.mxu0 0.0
    %403 = vmatmul.mubr.f32.gmra.mrb[0].mxu0 %v323
    %v404 = vpop.f32.mrb[0].mxu0
    %v405 = vadd.f32 %v314, %v404
    %v406 = vpop.f32.mrb[0].mxu0
    %407 = vmatprep.mubr.f32.mxu0 0.0
    %408 = vmatmul.mubr.f32.gmra.mrb[0].mxu0 %v326
    %v409 = vpop.f32.mrb[0].mxu0
    %v410 = vadd.f32 %v314, %v409
    %v411 = vpop.f32.mrb[0].mxu0
    %412 = vdwg.mxu0
    %vm413 = vcmask 7168
    %414 = vst.msk [vmem:[%s7] sm:$0xff] %vm413, %v395
    %415 = vst.msk [vmem:[%s7 + $0x8] sm:$0xff] %vm413, %v400
    %416 = vst.msk [vmem:[%s7 + $0x10] sm:$0xff] %vm413, %v405
    %417 = vst.msk [vmem:[%s7 + $0x18] sm:$0xff] %vm413, %v410
    // Predicated region
    $region38: #{tpu_custom_call.1} parent=1 // pred_check
      _
    $region39: #{tpu_custom_call.1} parent=1 // pred_check_branch
      %419 = sbr.rel (0) target = $region41
    $region40: #{tpu_custom_call.1} parent=1 // pred_region
      _
    $region41: #{tpu_custom_call.1} parent=1 // pred_fallthru
      _
    // Predicated region
    $region42: #{tpu_custom_call.1} parent=1 // pred_check
      _
    $region43: #{tpu_custom_call.1} parent=1 // pred_check_branch
      %421 = sbr.rel (0) target = $region45
    $region44: #{tpu_custom_call.1} parent=1 // pred_region
      _
    $region45: #{tpu_custom_call.1} parent=1 // pred_fallthru
      _
    %422 = vsyncpa [#allocation4], 1
    %423 = vsyncpa [#allocation6], 1

// kernel: tpu_custom_call.1
$region0: #{tpu_custom_call.1}
  #allocation0 [shape = 'u32[]', space=smem, size = 0x4, offset = 0x4, fixed_abs, tag = 'smem constant byte address 0x4 - core index']
  #allocation1 [shape = 'u32[144,128]{1,0:T(1,128)}', space=vmem, size = 0x12000, scoped, tag = 'internal scratch']
  #allocation2 [shape = 'f32[1,1]{1,0:T(1,128)S(1)}', space=vmem, size = 0x200, scoped, tag = 'scoped memory for tpu_custom_call.1']
  %s0 = inlined_call_operand.hbm [shape: f32[32,64], index: 0, kind: input, shape index: {}]
  %s1 = inlined_call_operand.vmem [shape: f32[64,64], index: 1, kind: input, shape index: {}]
  %s2 = inlined_call_operand.vmem [shape: f32[1,64], index: 2, kind: input, shape index: {}]
  %s3 = inlined_call_operand.hbm [shape: f32[64,64], index: 3, kind: input, shape index: {}]
  %s4 = inlined_call_operand.vmem [shape: f32[1,64], index: 4, kind: input, shape index: {}]
  %s5 = inlined_call_operand.vmem [shape: f32[64,1], index: 5, kind: input, shape index: {}]
  %s6 = inlined_call_operand.<no memory space> [shape: f32[1,1], index: 6, kind: input, shape index: {}]
  %s7 = inlined_call_operand.vmem [shape: f32[32,1], index: 7, kind: output, shape index: {}]
  %s8 = sld [smem:[#allocation0]]
  $region46: #{tpu_custom_call.1} parent=0
    _
  %s10 = ssub.s32 1, %s8
  %s11 = scalar_select 0, %s10, %s8
  %v12 = vstv %s6
  %13 = vst [vmem:[#allocation2] sm:$0x1] %v12
  $region1: #{tpu_custom_call.1} parent=0
    #allocation3 [shape = 'u8[16384]{0}', space=vmem, size = 0x4000, scoped, tag = 'input window, operand 0, single buffered']
    #allocation4 [shape = 's32[1]{0}', space=sflag, size = 0x4, scoped, tag = 'scoped memory for tpu_custom_call.1']
    #allocation5 [shape = 'u8[32768]{0}', space=vmem, size = 0x8000, scoped, tag = 'input window, operand 3, single buffered']
    #allocation6 [shape = 's32[1]{0}', space=sflag, size = 0x4, scoped, tag = 'scoped memory for tpu_custom_call.1']
    %14 = vsyncpa [#allocation4], 0
    %15 = vsyncpa [#allocation6], 0
    // Predicated region
    $region2: #{tpu_custom_call.1} parent=1 // pred_check
      _
    $region3: #{tpu_custom_call.1} parent=1 // pred_check_branch
      %17 = sbr.rel (0) target = $region5
    $region4: #{tpu_custom_call.1} parent=1 // pred_region
      %s19 = ssub.s32 512, 512
      %20 = vsyncadd [#allocation4], %s19
      %s21 = sshll.u32 [#allocation3], 4
      %s22 = int_to_ptr.vmem [resolvable:$true] %s21
      %27 = dma.hbm_to_vmem [thread:$0]  %s0, 512, %s22, [#allocation4], 128, 128, 8
    $region5: #{tpu_custom_call.1} parent=1 // pred_fallthru
      _
    // Predicated region
    $region6: #{tpu_custom_call.1} parent=1 // pred_check
      _
    $region7: #{tpu_custom_call.1} parent=1 // pred_check_branch
      %29 = sbr.rel (0) target = $region9
    $region8: #{tpu_custom_call.1} parent=1 // pred_region
      _
    $region9: #{tpu_custom_call.1} parent=1 // pred_fallthru
      _
    // Predicated region
    $region10: #{tpu_custom_call.1} parent=1 // pred_check
      _
    $region11: #{tpu_custom_call.1} parent=1 // pred_check_branch
      %31 = sbr.rel (0) target = $region13
    $region12: #{tpu_custom_call.1} parent=1 // pred_region
      _
    $region13: #{tpu_custom_call.1} parent=1 // pred_fallthru
      _
    // Predicated region
    $region14: #{tpu_custom_call.1} parent=1 // pred_check
      _
    $region15: #{tpu_custom_call.1} parent=1 // pred_check_branch
      %33 = sbr.rel (0) target = $region17
    $region16: #{tpu_custom_call.1} parent=1 // pred_region
      %s35 = ssub.s32 1024, 1024
      %36 = vsyncadd [#allocation6], %s35
      %s37 = sshll.u32 [#allocation5], 4
      %s38 = int_to_ptr.vmem [resolvable:$true] %s37
      %43 = dma.hbm_to_vmem [thread:$0]  %s3, 1024, %s38, [#allocation6], 128, 128, 8
    $region17: #{tpu_custom_call.1} parent=1 // pred_fallthru
      _
    // Predicated region
    $region18: #{tpu_custom_call.1} parent=1 // pred_check
      _
    $region19: #{tpu_custom_call.1} parent=1 // pred_check_branch
      %45 = sbr.rel (0) target = $region21
    $region20: #{tpu_custom_call.1} parent=1 // pred_region
      _
    $region21: #{tpu_custom_call.1} parent=1 // pred_fallthru
      _
    // Predicated region
    $region22: #{tpu_custom_call.1} parent=1 // pred_check
      _
    $region23: #{tpu_custom_call.1} parent=1 // pred_check_branch
      %47 = sbr.rel (0) target = $region25
    $region24: #{tpu_custom_call.1} parent=1 // pred_region
      _
    $region25: #{tpu_custom_call.1} parent=1 // pred_fallthru
      _
    // Predicated region
    $region26: #{tpu_custom_call.1} parent=1 // pred_check
      _
    $region27: #{tpu_custom_call.1} parent=1 // pred_check_branch
      %49 = sbr.rel (0) target = $region29
    $region28: #{tpu_custom_call.1} parent=1 // pred_region
      _
    $region29: #{tpu_custom_call.1} parent=1 // pred_fallthru
      _
    // Predicated region
    $region30: #{tpu_custom_call.1} parent=1 // pred_check
      _
    $region31: #{tpu_custom_call.1} parent=1 // pred_check_branch
      %51 = sbr.rel (0) target = $region33
    $region32: #{tpu_custom_call.1} parent=1 // pred_region
      %52 = dma.done [#allocation4], 512
    $region33: #{tpu_custom_call.1} parent=1 // pred_fallthru
      _
    // Predicated region
    $region34: #{tpu_custom_call.1} parent=1 // pred_check
      _
    $region35: #{tpu_custom_call.1} parent=1 // pred_check_branch
      %54 = sbr.rel (0) target = $region37
    $region36: #{tpu_custom_call.1} parent=1 // pred_region
      %55 = dma.done [#allocation6], 1024
    $region37: #{tpu_custom_call.1} parent=1 // pred_fallthru
      _
    %v56 = vld [vmem:[#allocation3] sm:$0xff]
    %v57 = vld [vmem:[#allocation3 + $0x8] sm:$0xff]
    %v58 = vld [vmem:[#allocation3 + $0x10] sm:$0xff]
    %v59 = vld [vmem:[#allocation3 + $0x18] sm:$0xff]
    %v60 = vld [vmem:[%s1] sm:$0xff]
    %v61 = vld [vmem:[%s1 + $0x8] sm:$0xff]
    %v62 = vld [vmem:[%s1 + $0x10] sm:$0xff]
    %v63 = vld [vmem:[%s1 + $0x18] sm:$0xff]
    %v64 = vld [vmem:[%s1 + $0x20] sm:$0xff]
    %v65 = vld [vmem:[%s1 + $0x28] sm:$0xff]
    %v66 = vld [vmem:[%s1 + $0x30] sm:$0xff]
    %v67 = vld [vmem:[%s1 + $0x38] sm:$0xff]
    %v68 = vld [vmem:[%s2] sm:$0x1]
    %v70 = vlaneseq
    %v71 = vshrl.u32 %v70, 7
    %v72 = vsub.s32 0, %v71
    %v73 = vrot.slane %v68, %v72
    %vm75 = vcmask 523264
    %v77 = vsel %vm75, %v56, 0
    %v80 = vsel %vm75, %v57, 0
    %v83 = vsel %vm75, %v58, 0
    %v86 = vsel %vm75, %v59, 0
    %88 = vmatprep.subr.mxu0 0.0
    %89 = vmatpush1.msra.mxu0 %v60
    %90 = vmatprep.subr.mxu0 0.0
    %91 = vmatpush1.msra.mxu0 %v61
    %92 = vmatprep.subr.mxu0 0.0
    %93 = vmatpush1.msra.mxu0 %v62
    %94 = vmatprep.subr.mxu0 0.0
    %95 = vmatpush1.msra.mxu0 %v63
    %96 = vmatprep.subr.mxu0 0.0
    %97 = vmatpush1.msra.mxu0 %v64
    %98 = vmatprep.subr.mxu0 0.0
    %99 = vmatpush1.msra.mxu0 %v65
    %100 = vmatprep.subr.mxu0 0.0
    %101 = vmatpush1.msra.mxu0 %v66
    %102 = vmatprep.subr.mxu0 0.0
    %103 = vmatpush1.msra.mxu0 %v67
    %104 = vmatprep.subr.mxu0 0.0
    %105 = vmatpush1.msra.mxu0 0.0
    %106 = vmatprep.subr.mxu0 0.0
    %107 = vmatpush1.msra.mxu0 0.0
    %108 = vmatprep.subr.mxu0 0.0
    %109 = vmatpush1.msra.mxu0 0.0
    %110 = vmatprep.subr.mxu0 0.0
    %111 = vmatpush1.msra.mxu0 0.0
    %112 = vmatprep.subr.mxu0 0.0
    %113 = vmatpush1.msra.mxu0 0.0
    %114 = vmatprep.subr.mxu0 0.0
    %115 = vmatpush1.msra.mxu0 0.0
    %116 = vmatprep.subr.mxu0 0.0
    %117 = vmatpush1.msra.mxu0 0.0
    %118 = vmatprep.subr.mxu0 0.0
    %119 = vmatpush1.msra.mxu0 0.0
    %120 = vmatprep.subr.mxu0 0.0
    %121 = vmatpush1.msra.mxu0 0.0
    %122 = vmatprep.subr.mxu0 0.0
    %123 = vmatpush1.msra.mxu0 0.0
    %124 = vmatprep.subr.mxu0 0.0
    %125 = vmatpush1.msra.mxu0 0.0
    %126 = vmatprep.subr.mxu0 0.0
    %127 = vmatpush1.msra.mxu0 0.0
    %128 = vmatprep.subr.mxu0 0.0
    %129 = vmatpush1.msra.mxu0 0.0
    %130 = vmatprep.subr.mxu0 0.0
    %131 = vmatpush1.msra.mxu0 0.0
    %132 = vmatprep.subr.mxu0 0.0
    %133 = vmatpush1.msra.mxu0 0.0
    %134 = vmatprep.subr.mxu0 0.0
    %135 = vmatpush1.msra.mxu0 0.0
    %136 = vmatprep.subr.mxu0 0.0
    %137 = vmatpush1.msra.mxu0 0.0
    %138 = vmatprep.subr.mxu0 0.0
    %139 = vmatpush1.msra.mxu0 0.0
    %140 = vmatprep.subr.mxu0 0.0
    %141 = vmatpush1.msra.mxu0 0.0
    %142 = vmatprep.subr.mxu0 0.0
    %143 = vmatpush1.msra.mxu0 0.0
    %144 = vmatprep.subr.mxu0 0.0
    %145 = vmatpush1.msra.mxu0 0.0
    %146 = vmatprep.subr.mxu0 0.0
    %147 = vmatpush1.msra.mxu0 0.0
    %148 = vmatprep.subr.mxu0 0.0
    %149 = vmatpush1.msra.mxu0 0.0
    %150 = vmatprep.subr.mxu0 0.0
    %151 = vmatpush1.msra.mxu0 0.0
    %152 = vmatprep.mubr.f32.mxu0 0.0
    %153 = vmatmul.mubr.f32.gmra.mrb[0].mxu0 %v77
    %v154 = vpop.f32.mrb[0].mxu0
    %v155 = vadd.f32 %v73, %v154
    %v156 = vpop.f32.mrb[0].mxu0
    %157 = vmatprep.mubr.f32.mxu0 0.0
    %158 = vmatmul.mubr.f32.gmra.mrb[0].mxu0 %v80
    %v159 = vpop.f32.mrb[0].mxu0
    %v160 = vadd.f32 %v73, %v159
    %v161 = vpop.f32.mrb[0].mxu0
    %162 = vmatprep.mubr.f32.mxu0 0.0
    %163 = vmatmul.mubr.f32.gmra.mrb[0].mxu0 %v83
    %v164 = vpop.f32.mrb[0].mxu0
    %v165 = vadd.f32 %v73, %v164
    %v166 = vpop.f32.mrb[0].mxu0
    %167 = vmatprep.mubr.f32.mxu0 0.0
    %168 = vmatmul.mubr.f32.gmra.mrb[0].mxu0 %v86
    %v169 = vpop.f32.mrb[0].mxu0
    %v170 = vadd.f32 %v73, %v169
    %v171 = vpop.f32.mrb[0].mxu0
    %172 = vdwg.mxu0
    %v173 = vmul.f32 %v155, 0.01
    %v174 = vmul.f32 %v160, 0.01
    %v175 = vmul.f32 %v165, 0.01
    %v176 = vmul.f32 %v170, 0.01
    %v177 = vmax.f32 %v155, %v173
    %v178 = vmax.f32 %v160, %v174
    %v179 = vmax.f32 %v165, %v175
    %v180 = vmax.f32 %v170, %v176
    %v181 = vld [vmem:[#allocation5] sm:$0xff]
    %v182 = vld [vmem:[#allocation5 + $0x8] sm:$0xff]
    %v183 = vld [vmem:[#allocation5 + $0x10] sm:$0xff]
    %v184 = vld [vmem:[#allocation5 + $0x18] sm:$0xff]
    %v185 = vld [vmem:[#allocation5 + $0x20] sm:$0xff]
    %v186 = vld [vmem:[#allocation5 + $0x28] sm:$0xff]
    %v187 = vld [vmem:[#allocation5 + $0x30] sm:$0xff]
    %v188 = vld [vmem:[#allocation5 + $0x38] sm:$0xff]
    %v189 = vld [vmem:[%s4] sm:$0x1]
    %v191 = vlaneseq
    %v192 = vshrl.u32 %v191, 7
    %v193 = vsub.s32 0, %v192
    %v194 = vrot.slane %v189, %v193
    %v197 = vsel %vm75, %v177, 0
    %v200 = vsel %vm75, %v178, 0
    %v203 = vsel %vm75, %v179, 0
    %v206 = vsel %vm75, %v180, 0
    %208 = vmatprep.subr.mxu0 0.0
    %209 = vmatpush1.msra.mxu0 %v181
    %210 = vmatprep.subr.mxu0 0.0
    %211 = vmatpush1.msra.mxu0 %v182
    %212 = vmatprep.subr.mxu0 0.0
    %213 = vmatpush1.msra.mxu0 %v183
    %214 = vmatprep.subr.mxu0 0.0
    %215 = vmatpush1.msra.mxu0 %v184
    %216 = vmatprep.subr.mxu0 0.0
    %217 = vmatpush1.msra.mxu0 %v185
    %218 = vmatprep.subr.mxu0 0.0
    %219 = vmatpush1.msra.mxu0 %v186
    %220 = vmatprep.subr.mxu0 0.0
    %221 = vmatpush1.msra.mxu0 %v187
    %222 = vmatprep.subr.mxu0 0.0
    %223 = vmatpush1.msra.mxu0 %v188
    %224 = vmatprep.subr.mxu0 0.0
    %225 = vmatpush1.msra.mxu0 0.0
    %226 = vmatprep.subr.mxu0 0.0
    %227 = vmatpush1.msra.mxu0 0.0
    %228 = vmatprep.subr.mxu0 0.0
    %229 = vmatpush1.msra.mxu0 0.0
    %230 = vmatprep.subr.mxu0 0.0
    %231 = vmatpush1.msra.mxu0 0.0
    %232 = vmatprep.subr.mxu0 0.0
    %233 = vmatpush1.msra.mxu0 0.0
    %234 = vmatprep.subr.mxu0 0.0
    %235 = vmatpush1.msra.mxu0 0.0
    %236 = vmatprep.subr.mxu0 0.0
    %237 = vmatpush1.msra.mxu0 0.0
    %238 = vmatprep.subr.mxu0 0.0
    %239 = vmatpush1.msra.mxu0 0.0
    %240 = vmatprep.subr.mxu0 0.0
    %241 = vmatpush1.msra.mxu0 0.0
    %242 = vmatprep.subr.mxu0 0.0
    %243 = vmatpush1.msra.mxu0 0.0
    %244 = vmatprep.subr.mxu0 0.0
    %245 = vmatpush1.msra.mxu0 0.0
    %246 = vmatprep.subr.mxu0 0.0
    %247 = vmatpush1.msra.mxu0 0.0
    %248 = vmatprep.subr.mxu0 0.0
    %249 = vmatpush1.msra.mxu0 0.0
    %250 = vmatprep.subr.mxu0 0.0
    %251 = vmatpush1.msra.mxu0 0.0
    %252 = vmatprep.subr.mxu0 0.0
    %253 = vmatpush1.msra.mxu0 0.0
    %254 = vmatprep.subr.mxu0 0.0
    %255 = vmatpush1.msra.mxu0 0.0
    %256 = vmatprep.subr.mxu0 0.0
    %257 = vmatpush1.msra.mxu0 0.0
    %258 = vmatprep.subr.mxu0 0.0
    %259 = vmatpush1.msra.mxu0 0.0
    %260 = vmatprep.subr.mxu0 0.0
    %261 = vmatpush1.msra.mxu0 0.0
    %262 = vmatprep.subr.mxu0 0.0
    %263 = vmatpush1.msra.mxu0 0.0
    %264 = vmatprep.subr.mxu0 0.0
    %265 = vmatpush1.msra.mxu0 0.0
    %266 = vmatprep.subr.mxu0 0.0
    %267 = vmatpush1.msra.mxu0 0.0
    %268 = vmatprep.subr.mxu0 0.0
    %269 = vmatpush1.msra.mxu0 0.0
    %270 = vmatprep.subr.mxu0 0.0
    %271 = vmatpush1.msra.mxu0 0.0
    %272 = vmatprep.mubr.f32.mxu0 0.0
    %273 = vmatmul.mubr.f32.gmra.mrb[0].mxu0 %v197
    %v274 = vpop.f32.mrb[0].mxu0
    %v275 = vadd.f32 %v194, %v274
    %v276 = vpop.f32.mrb[0].mxu0
    %277 = vmatprep.mubr.f32.mxu0 0.0
    %278 = vmatmul.mubr.f32.gmra.mrb[0].mxu0 %v200
    %v279 = vpop.f32.mrb[0].mxu0
    %v280 = vadd.f32 %v194, %v279
    %v281 = vpop.f32.mrb[0].mxu0
    %282 = vmatprep.mubr.f32.mxu0 0.0
    %283 = vmatmul.mubr.f32.gmra.mrb[0].mxu0 %v203
    %v284 = vpop.f32.mrb[0].mxu0
    %v285 = vadd.f32 %v194, %v284
    %v286 = vpop.f32.mrb[0].mxu0
    %287 = vmatprep.mubr.f32.mxu0 0.0
    %288 = vmatmul.mubr.f32.gmra.mrb[0].mxu0 %v206
    %v289 = vpop.f32.mrb[0].mxu0
    %v290 = vadd.f32 %v194, %v289
    %v291 = vpop.f32.mrb[0].mxu0
    %292 = vdwg.mxu0
    %v293 = vmul.f32 %v275, 0.01
    %v294 = vmul.f32 %v280, 0.01
    %v295 = vmul.f32 %v285, 0.01
    %v296 = vmul.f32 %v290, 0.01
    %v297 = vmax.f32 %v275, %v293
    %v298 = vmax.f32 %v280, %v294
    %v299 = vmax.f32 %v285, %v295
    %v300 = vmax.f32 %v290, %v296
    %v301 = vld [vmem:[%s5] sm:$0xff]
    %v302 = vld [vmem:[%s5 + $0x8] sm:$0xff]
    %v303 = vld [vmem:[%s5 + $0x10] sm:$0xff]
    %v304 = vld [vmem:[%s5 + $0x18] sm:$0xff]
    %v305 = vld [vmem:[%s5 + $0x20] sm:$0xff]
    %v306 = vld [vmem:[%s5 + $0x28] sm:$0xff]
    %v307 = vld [vmem:[%s5 + $0x30] sm:$0xff]
    %v308 = vld [vmem:[%s5 + $0x38] sm:$0xff]
    %v309 = vld [vmem:[#allocation2] sm:$0x1]
    %v311 = vlaneseq
    %v312 = vshrl.u32 %v311, 7
    %v313 = vsub.s32 0, %v312
    %v314 = vrot.slane %v309, %v313
    %v317 = vsel %vm75, %v297, 0
    %v320 = vsel %vm75, %v298, 0
    %v323 = vsel %vm75, %v299, 0
    %v326 = vsel %vm75, %v300, 0
    %328 = vmatprep.subr.mxu0 0.0
    %329 = vmatpush1.msra.mxu0 %v301
    %330 = vmatprep.subr.mxu0 0.0
    %331 = vmatpush1.msra.mxu0 %v302
    %332 = vmatprep.subr.mxu0 0.0
    %333 = vmatpush1.msra.mxu0 %v303
    %334 = vmatprep.subr.mxu0 0.0
    %335 = vmatpush1.msra.mxu0 %v304
    %336 = vmatprep.subr.mxu0 0.0
    %337 = vmatpush1.msra.mxu0 %v305
    %338 = vmatprep.subr.mxu0 0.0
    %339 = vmatpush1.msra.mxu0 %v306
    %340 = vmatprep.subr.mxu0 0.0
    %341 = vmatpush1.msra.mxu0 %v307
    %342 = vmatprep.subr.mxu0 0.0
    %343 = vmatpush1.msra.mxu0 %v308
    %344 = vmatprep.subr.mxu0 0.0
    %345 = vmatpush1.msra.mxu0 0.0
    %346 = vmatprep.subr.mxu0 0.0
    %347 = vmatpush1.msra.mxu0 0.0
    %348 = vmatprep.subr.mxu0 0.0
    %349 = vmatpush1.msra.mxu0 0.0
    %350 = vmatprep.subr.mxu0 0.0
    %351 = vmatpush1.msra.mxu0 0.0
    %352 = vmatprep.subr.mxu0 0.0
    %353 = vmatpush1.msra.mxu0 0.0
    %354 = vmatprep.subr.mxu0 0.0
    %355 = vmatpush1.msra.mxu0 0.0
    %356 = vmatprep.subr.mxu0 0.0
    %357 = vmatpush1.msra.mxu0 0.0
    %358 = vmatprep.subr.mxu0 0.0
    %359 = vmatpush1.msra.mxu0 0.0
    %360 = vmatprep.subr.mxu0 0.0
    %361 = vmatpush1.msra.mxu0 0.0
    %362 = vmatprep.subr.mxu0 0.0
    %363 = vmatpush1.msra.mxu0 0.0
    %364 = vmatprep.subr.mxu0 0.0
    %365 = vmatpush1.msra.mxu0 0.0
    %366 = vmatprep.subr.mxu0 0.0
    %367 = vmatpush1.msra.mxu0 0.0
    %368 = vmatprep.subr.mxu0 0.0
    %369 = vmatpush1.msra.mxu0 0.0
    %370 = vmatprep.subr.mxu0 0.0
    %371 = vmatpush1.msra.mxu0 0.0
    %372 = vmatprep.subr.mxu0 0.0
    %373 = vmatpush1.msra.mxu0 0.0
    %374 = vmatprep.subr.mxu0 0.0
    %375 = vmatpush1.msra.mxu0 0.0
    %376 = vmatprep.subr.mxu0 0.0
    %377 = vmatpush1.msra.mxu0 0.0
    %378 = vmatprep.subr.mxu0 0.0
    %379 = vmatpush1.msra.mxu0 0.0
    %380 = vmatprep.subr.mxu0 0.0
    %381 = vmatpush1.msra.mxu0 0.0
    %382 = vmatprep.subr.mxu0 0.0
    %383 = vmatpush1.msra.mxu0 0.0
    %384 = vmatprep.subr.mxu0 0.0
    %385 = vmatpush1.msra.mxu0 0.0
    %386 = vmatprep.subr.mxu0 0.0
    %387 = vmatpush1.msra.mxu0 0.0
    %388 = vmatprep.subr.mxu0 0.0
    %389 = vmatpush1.msra.mxu0 0.0
    %390 = vmatprep.subr.mxu0 0.0
    %391 = vmatpush1.msra.mxu0 0.0
    %392 = vmatprep.mubr.f32.mxu0 0.0
    %393 = vmatmul.mubr.f32.gmra.mrb[0].mxu0 %v317
    %v394 = vpop.f32.mrb[0].mxu0
    %v395 = vadd.f32 %v314, %v394
    %v396 = vpop.f32.mrb[0].mxu0
    %397 = vmatprep.mubr.f32.mxu0 0.0
    %398 = vmatmul.mubr.f32.gmra.mrb[0].mxu0 %v320
    %v399 = vpop.f32.mrb[0].mxu0
    %v400 = vadd.f32 %v314, %v399
    %v401 = vpop.f32.mrb[0].mxu0
    %402 = vmatprep.mubr.f32.mxu0 0.0
    %403 = vmatmul.mubr.f32.gmra.mrb[0].mxu0 %v323
    %v404 = vpop.f32.mrb[0].mxu0
    %v405 = vadd.f32 %v314, %v404
    %v406 = vpop.f32.mrb[0].mxu0
    %407 = vmatprep.mubr.f32.mxu0 0.0
    %408 = vmatmul.mubr.f32.gmra.mrb[0].mxu0 %v326
    %v409 = vpop.f32.mrb[0].mxu0
    %v410 = vadd.f32 %v314, %v409
    %v411 = vpop.f32.mrb[0].mxu0
    %412 = vdwg.mxu0
    %vm413 = vcmask 7168
    %414 = vst.msk [vmem:[%s7] sm:$0xff] %vm413, %v395
    %415 = vst.msk [vmem:[%s7 + $0x8] sm:$0xff] %vm413, %v400
    %416 = vst.msk [vmem:[%s7 + $0x10] sm:$0xff] %vm413, %v405
    %417 = vst.msk [vmem:[%s7 + $0x18] sm:$0xff] %vm413, %v410
    // Predicated region
    $region38: #{tpu_custom_call.1} parent=1 // pred_check
      _
    $region39: #{tpu_custom_call.1} parent=1 // pred_check_branch
      %419 = sbr.rel (0) target = $region41
    $region40: #{tpu_custom_call.1} parent=1 // pred_region
      _
    $region41: #{tpu_custom_call.1} parent=1 // pred_fallthru
      _
    // Predicated region
    $region42: #{tpu_custom_call.1} parent=1 // pred_check
      _
    $region43: #{tpu_custom_call.1} parent=1 // pred_check_branch
      %421 = sbr.rel (0) target = $region45
    $region44: #{tpu_custom_call.1} parent=1 // pred_region
      _
    $region45: #{tpu_custom_call.1} parent=1 // pred_fallthru
      _
    %422 = vsyncpa [#allocation4], 1
    %423 = vsyncpa [#allocation6], 1

</llo_original>
